<compile_context>
chip_gen: v6e
topology: v6e:2x2x1
jax: 0.10.0
libtpu: 0.0.40
codegen_flags: <defaults>
</compile_context>

<pallas_src>
import jax
import jax.numpy as jnp
from jax import lax
from jax.experimental import pallas as pl
from jax.experimental.pallas import tpu as pltpu


def _round_up(x, m):
    return ((x + m - 1) // m) * m


def _qkv_linear_kernel(x_ref, w_ref, b_ref, o_ref, acc_ref):
    """One (tm, tn) output tile, accumulated over the K grid axis.

    x_ref  : (tm, tk) bf16   activation tile
    w_ref  : (tn, tk) bf16   weight tile, natural (N, K) layout
    b_ref  : (1, tn)  f32    bias tile
    o_ref  : (tm, tn) out dtype
    acc_ref: (tm, tn) f32    VMEM accumulator scratch
    """
    kk = pl.program_id(2)

    @pl.when(kk == 0)
    def _():
        acc_ref[...] = jnp.zeros_like(acc_ref)

    # Contract x's K dim with W's K dim (dim 1 of both): avoids materializing
    # W.T in HBM; the MXU handles the transposed-RHS contraction natively.
    acc_ref[...] += lax.dot_general(
        x_ref[...], w_ref[...],
        dimension_numbers=(((1,), (1,)), ((), ())),
        preferred_element_type=jnp.float32,
    )

    @pl.when(kk == pl.num_programs(2) - 1)
    def _():
        o_ref[...] = (acc_ref[...] + b_ref[...]).astype(o_ref.dtype)


def qkv_linear_pallas(x, W, b, hidden_channels, num_heads):
    """Pallas implementation of MultiHeadQKVLinear.forward.

    x : (..., items, in_channels)
    W : (3*hidden_channels*num_heads, in_channels)   (PyTorch Linear weight)
    b : (3*hidden_channels*num_heads,)
    Returns q, k, v each of shape (..., num_heads, items, hidden_channels).
    """
    *batch_dims, items, in_ch = x.shape
    out_ch = W.shape[0]
    assert out_ch == 3 * hidden_channels * num_heads
    out_dtype = x.dtype

    # --- weight prep (layout only; hoist to param-load time in a real model) -
    # Module channel order is (qkv, hidden, head) with head innermost.
    # Re-order rows to (qkv, head, hidden) so the post-kernel rearrange keeps
    # the hidden axis contiguous.
    W_p = jnp.transpose(
        W.reshape(3, hidden_channels, num_heads, in_ch), (0, 2, 1, 3)
    ).reshape(out_ch, in_ch)
    b_p = jnp.transpose(
        b.reshape(3, hidden_channels, num_heads), (0, 2, 1)
    ).reshape(out_ch)

    x2 = x.reshape(-1, in_ch)
    M, K = x2.shape
    N = out_ch

    # --- tile selection (MXU-friendly, lane-dense, VMEM-safe) ----------------
    tm = min(256, _round_up(M, 16))          # fill MXU sublanes, bf16-friendly
    M_pad = _round_up(M, tm)
    N_pad = _round_up(N, 128)                # lane-dense output stores
    tn = 256 if (N_pad % 256 == 0) else 128
    if K <= 512:
        tk, K_pad = K, K                     # full-K block (== array dim)
    else:
        tk = 512
        K_pad = _round_up(K, tk)

    # --- pad + cast MXU operands to bf16; keep f32 bias / accumulation -------
    x_p = jnp.pad(x2.astype(jnp.bfloat16), ((0, M_pad - M), (0, K_pad - K)))
    w_p = jnp.pad(W_p.astype(jnp.bfloat16), ((0, N_pad - N), (0, K_pad - K)))
    b_pad = jnp.pad(b_p.astype(jnp.float32), (0, N_pad - N)).reshape(1, N_pad)

    grid = (M_pad // tm, N_pad // tn, K_pad // tk)

    cost = pl.CostEstimate(
        flops=2 * M_pad * K_pad * N_pad,
        transcendentals=0,
        bytes_accessed=(x_p.size * 2 + w_p.size * 2 + b_pad.size * 4
                        + M_pad * N_pad * jnp.dtype(out_dtype).itemsize),
    )

    y = pl.pallas_call(
        _qkv_linear_kernel,
        out_shape=jax.ShapeDtypeStruct((M_pad, N_pad), out_dtype),
        grid_spec=pltpu.PrefetchScalarGridSpec(
            num_scalar_prefetch=0,
            grid=grid,
            in_specs=[
                pl.BlockSpec((tm, tk), lambda i, j, k: (i, k)),
                pl.BlockSpec((tn, tk), lambda i, j, k: (j, k)),
                pl.BlockSpec((1, tn), lambda i, j, k: (0, j)),
            ],
            out_specs=pl.BlockSpec((tm, tn), lambda i, j, k: (i, j)),
            scratch_shapes=[pltpu.VMEM((tm, tn), jnp.float32)],
        ),
        compiler_params=pltpu.CompilerParams(
            dimension_semantics=("parallel", "parallel", "arbitrary")),
        cost_estimate=cost,
    )(x_p, w_p, b_pad)

    # Strip padding, then rearrange to (3, batch..., heads, items, hidden).
    # Thanks to the weight row permutation the channel factor order here is
    # (qkv, heads, hidden): only items<->heads swap, hidden stays contiguous.
    y = y[:M, :N].reshape(*batch_dims, items, 3, num_heads, hidden_channels)
    nb = len(batch_dims)
    perm = (nb + 1,) + tuple(range(nb)) + (nb + 2, nb, nb + 3)
    qkv = jnp.transpose(y, perm)
    return qkv[0], qkv[1], qkv[2]


def qkv_linear_ref(x, W, b, hidden_channels, num_heads):
    """Plain-JAX reference mirroring the PyTorch module (f32 throughout)."""
    y = jnp.einsum("...i,oi->...o", x, W) + b
    *batch_dims, items, _ = x.shape
    y = y.reshape(*batch_dims, items, 3, hidden_channels, num_heads)
    nb = len(batch_dims)
    perm = (nb + 1,) + tuple(range(nb)) + (nb + 3, nb, nb + 2)
    qkv = jnp.transpose(y, perm)
    return qkv[0], qkv[1], qkv[2]


if __name__ == "__main__":
    # Small shapes consistent with the module's forward.
    batch = 2
    items = 8
    in_channels = 32
    hidden_channels = 16
    num_heads = 2
    out_channels = 3 * hidden_channels * num_heads  # 96

    key = jax.random.PRNGKey(0)
    kx, kw, kb = jax.random.split(key, 3)

    x = jax.random.normal(kx, (batch, items, in_channels), dtype=jnp.float32)
    # Deterministic synthetic parameters (nn.Linear weight/bias shapes).
    bound = 1.0 / (in_channels ** 0.5)
    W = jax.random.uniform(kw, (out_channels, in_channels),
                           minval=-bound, maxval=bound, dtype=jnp.float32)
    b = jax.random.uniform(kb, (out_channels,),
                           minval=-bound, maxval=bound, dtype=jnp.float32)

    q, k, v = qkv_linear_pallas(x, W, b, hidden_channels, num_heads)
    jax.block_until_ready((q, k, v))

    # Correctness check against the plain-JAX (f32) reference.  The kernel
    # uses bf16 MXU operands with f32 accumulation, so tolerances are set
    # accordingly.
    q_r, k_r, v_r = qkv_linear_ref(x, W, b, hidden_channels, num_heads)
    assert q.shape == (batch, num_heads, items, hidden_channels)
    assert k.shape == (batch, num_heads, items, hidden_channels)
    assert v.shape == (batch, num_heads, items, hidden_channels)
    for got, want in ((q, q_r), (k, k_r), (v, v_r)):
        assert jnp.allclose(got, want, atol=3e-2, rtol=3e-2)

    print("KERNEL_OK")
</pallas_src>

<mosaic_0001>
module attributes {stable_mosaic.version = 11 : i64} {
  func.func @_qkv_linear_kernel(%arg0: i32, %arg1: i32, %arg2: i32, %arg3: memref<16x32xbf16, #tpu.memory_space<vmem>>, %arg4: memref<128x32xbf16, #tpu.memory_space<vmem>>, %arg5: memref<1x128xf32, #tpu.memory_space<vmem>>, %arg6: memref<16x128xf32, #tpu.memory_space<vmem>>, %arg7: memref<16x128xf32, #tpu.memory_space<vmem>>) attributes {dimension_semantics = [#tpu.dimension_semantics<parallel>, #tpu.dimension_semantics<parallel>, #tpu.dimension_semantics<arbitrary>], iteration_bounds = array<i64: 1, 1, 1>, scalar_prefetch = 0 : i64, scratch_operands = 1 : i64, tpu.core_type = #tpu.core_type<tc>, window_params = [{transform_indices = @transform_0, window_bounds = array<i64: 16, 32>}, {transform_indices = @transform_1, window_bounds = array<i64: 128, 32>}, {transform_indices = @transform_2, window_bounds = array<i64: 1, 128>}, {transform_indices = @transform_3, window_bounds = array<i64: 16, 128>}]} {
    %c0_i32 = arith.constant 0 : i32
    %0 = arith.cmpi eq, %arg2, %c0_i32 : i32
    %1 = arith.extui %0 : i1 to i32
    %c0_i32_0 = arith.constant 0 : i32
    %2 = arith.cmpi ne, %1, %c0_i32_0 : i32
    scf.if %2 {
      %cst_10 = arith.constant 0.000000e+00 : f32
      %12 = vector.broadcast %cst_10 : f32 to vector<16x128xf32>
      %c0_11 = arith.constant 0 : index
      %c0_12 = arith.constant 0 : index
      %13 = vector.load %arg7[%c0_11, %c0_12] : memref<16x128xf32, #tpu.memory_space<vmem>>, vector<16x128xf32>
      tpu.vector_store %arg7[%c0_11, %c0_12], %12 {strides = array<i32>} : memref<16x128xf32, #tpu.memory_space<vmem>>, vector<16x128xf32>,
    } else {
    }
    %c0 = arith.constant 0 : index
    %c0_1 = arith.constant 0 : index
    %3 = vector.load %arg7[%c0, %c0_1] : memref<16x128xf32, #tpu.memory_space<vmem>>, vector<16x128xf32>
    %c0_2 = arith.constant 0 : index
    %c0_3 = arith.constant 0 : index
    %4 = vector.load %arg3[%c0_2, %c0_3] : memref<16x32xbf16, #tpu.memory_space<vmem>>, vector<16x32xbf16>
    %c0_4 = arith.constant 0 : index
    %c0_5 = arith.constant 0 : index
    %5 = vector.load %arg4[%c0_4, %c0_5] : memref<128x32xbf16, #tpu.memory_space<vmem>>, vector<128x32xbf16>
    %cst = arith.constant dense<0.000000e+00> : vector<16x128xf32>
    %6 = tpu.matmul %4, %5, %cst {dimension_numbers = #tpu.dot_dimension_numbers<[1], [1], [0], [0], [0, 0, 1, 0], [], []>} : vector<16x32xbf16>, vector<128x32xbf16>, vector<16x128xf32> -> vector<16x128xf32>
    %7 = arith.addf %3, %6 : vector<16x128xf32>
    %c0_6 = arith.constant 0 : index
    %c0_7 = arith.constant 0 : index
    %8 = vector.load %arg7[%c0_6, %c0_7] : memref<16x128xf32, #tpu.memory_space<vmem>>, vector<16x128xf32>
    tpu.vector_store %arg7[%c0_6, %c0_7], %7 {strides = array<i32>} : memref<16x128xf32, #tpu.memory_space<vmem>>, vector<16x128xf32>,
    %c0_i32_8 = arith.constant 0 : i32
    %9 = arith.cmpi eq, %arg2, %c0_i32_8 : i32
    %10 = arith.extui %9 : i1 to i32
    %c0_i32_9 = arith.constant 0 : i32
    %11 = arith.cmpi ne, %10, %c0_i32_9 : i32
    scf.if %11 {
      %c0_10 = arith.constant 0 : index
      %c0_11 = arith.constant 0 : index
      %12 = vector.load %arg7[%c0_10, %c0_11] : memref<16x128xf32, #tpu.memory_space<vmem>>, vector<16x128xf32>
      %c0_12 = arith.constant 0 : index
      %c0_13 = arith.constant 0 : index
      %13 = vector.load %arg5[%c0_12, %c0_13] : memref<1x128xf32, #tpu.memory_space<vmem>>, vector<1x128xf32>
      %14 = vector.broadcast %13 : vector<1x128xf32> to vector<16x128xf32>
      %15 = arith.addf %12, %14 : vector<16x128xf32>
      %c0_14 = arith.constant 0 : index
      %c0_15 = arith.constant 0 : index
      %16 = vector.load %arg6[%c0_14, %c0_15] : memref<16x128xf32, #tpu.memory_space<vmem>>, vector<16x128xf32>
      tpu.vector_store %arg6[%c0_14, %c0_15], %15 {strides = array<i32>} : memref<16x128xf32, #tpu.memory_space<vmem>>, vector<16x128xf32>,
    } else {
    }
    return
  }
  func.func @transform_0(%arg0: i32, %arg1: i32, %arg2: i32) -> (i32, i32) {
    %c0_i32 = arith.constant 0 : i32
    return %arg0, %arg2 : i32, i32
  }
  func.func @transform_1(%arg0: i32, %arg1: i32, %arg2: i32) -> (i32, i32) {
    %c0_i32 = arith.constant 0 : i32
    return %arg1, %arg2 : i32, i32
  }
  func.func @transform_2(%arg0: i32, %arg1: i32, %arg2: i32) -> (i32, i32) {
    %c0_i32 = arith.constant 0 : i32
    %c0_i32_0 = arith.constant 0 : i32
    return %c0_i32, %arg1 : i32, i32
  }
  func.func @transform_3(%arg0: i32, %arg1: i32, %arg2: i32) -> (i32, i32) {
    %c0_i32 = arith.constant 0 : i32
    return %arg0, %arg1 : i32, i32
  }
}

</mosaic_0001>

<llo_original>
// kernel: tpu_custom_call.1
$region0: #{tpu_custom_call.1}
  #allocation0 [shape = 'u32[]', space=smem, size = 0x4, offset = 0x4, fixed_abs, tag = 'smem constant byte address 0x4 - core index']
  #allocation1 [shape = 'u32[144,128]{1,0:T(1,128)}', space=vmem, size = 0x12000, scoped, tag = 'internal scratch']
  #allocation2 [shape = 'f32[16,128]{1,0:T(8,128)}', space=vmem, size = 0x2000, scoped, tag = 'scratch operand']
  %s0 = inlined_call_operand.vmem [shape: bf16[16,32], index: 0, kind: input, shape index: {}]
  %s1 = inlined_call_operand.vmem [shape: bf16[128,32], index: 1, kind: input, shape index: {}]
  %s2 = inlined_call_operand.vmem [shape: f32[1,128], index: 2, kind: input, shape index: {}]
  %s3 = inlined_call_operand.hbm [shape: f32[16,128], index: 3, kind: output, shape index: {}]
  %s4 = sld [smem:[#allocation0]]
  $region30: #{tpu_custom_call.1} parent=0
    _
  %s6 = ssub.s32 1, %s4
  %s7 = scalar_select 0, %s6, %s4
  $region1: #{tpu_custom_call.1} parent=0
    #allocation3 [shape = 'u8[8192]{0}', space=vmem, size = 0x2000, scoped, tag = 'output window, operand 0, single buffered']
    #allocation4 [shape = 's32[1]{0}', space=sflag, size = 0x4, scoped, tag = 'scoped memory for tpu_custom_call.1']
    %8 = vsyncpa [#allocation4], 0
    // Predicated region
    $region2: #{tpu_custom_call.1} parent=1 // pred_check
      _
    $region3: #{tpu_custom_call.1} parent=1 // pred_check_branch
      %10 = sbr.rel (0) target = $region5
    $region4: #{tpu_custom_call.1} parent=1 // pred_region
      _
    $region5: #{tpu_custom_call.1} parent=1 // pred_fallthru
      _
    // Predicated region
    $region6: #{tpu_custom_call.1} parent=1 // pred_check
      _
    $region7: #{tpu_custom_call.1} parent=1 // pred_check_branch
      %12 = sbr.rel (0) target = $region9
    $region8: #{tpu_custom_call.1} parent=1 // pred_region
      _
    $region9: #{tpu_custom_call.1} parent=1 // pred_fallthru
      _
    // Predicated region
    $region10: #{tpu_custom_call.1} parent=1 // pred_check
      _
    $region11: #{tpu_custom_call.1} parent=1 // pred_check_branch
      %14 = sbr.rel (0) target = $region13
    $region12: #{tpu_custom_call.1} parent=1 // pred_region
      _
    $region13: #{tpu_custom_call.1} parent=1 // pred_fallthru
      _
    %p16 = scmp.eq.s32.totalorder 0, 0
    // Predicated region
    $region14: #{tpu_custom_call.1} parent=1 // pred_check
      %p17 = pneg %p16
    $region15: #{tpu_custom_call.1} parent=1 // pred_check_branch
      %19 = sbr.rel (%p17) target = $region17
    $region16: #{tpu_custom_call.1} parent=1 // pred_region
      %20 = vst [vmem:[#allocation2] sm:$0xff] 0.0
      %21 = vst [vmem:[#allocation2 + $0x8] sm:$0xff] 0.0
    $region17: #{tpu_custom_call.1} parent=1 // pred_fallthru
      _
    %v22 = vld [vmem:[#allocation2] sm:$0xff]
    %v23 = vld [vmem:[#allocation2 + $0x8] sm:$0xff]
    %v24 = vld [vmem:[%s0] sm:$0xf]
    %v25 = vld [vmem:[%s0 + $0x4] sm:$0xf]
    %v26 = vld [vmem:[%s1] sm:$0xf]
    %v27 = vld [vmem:[%s1 + $0x4] sm:$0xf]
    %v28 = vld [vmem:[%s1 + $0x8] sm:$0xf]
    %v29 = vld [vmem:[%s1 + $0xc] sm:$0xf]
    %v30 = vld [vmem:[%s1 + $0x10] sm:$0xf]
    %v31 = vld [vmem:[%s1 + $0x14] sm:$0xf]
    %v32 = vld [vmem:[%s1 + $0x18] sm:$0xf]
    %v33 = vld [vmem:[%s1 + $0x1c] sm:$0xf]
    %v34 = vld [vmem:[%s1 + $0x20] sm:$0xf]
    %v35 = vld [vmem:[%s1 + $0x24] sm:$0xf]
    %v36 = vld [vmem:[%s1 + $0x28] sm:$0xf]
    %v37 = vld [vmem:[%s1 + $0x2c] sm:$0xf]
    %v38 = vld [vmem:[%s1 + $0x30] sm:$0xf]
    %v39 = vld [vmem:[%s1 + $0x34] sm:$0xf]
    %v40 = vld [vmem:[%s1 + $0x38] sm:$0xf]
    %v41 = vld [vmem:[%s1 + $0x3c] sm:$0xf]
    %v44 = vunpack.c.l.b16 %v24
    %v45 = vunpack.c.l.b16 %v25
    %v46 = vpack.c.b16 %v45, %v44
    %v63 = vunpack.c.l.b16 %v26
    %v64 = vunpack.c.l.b16 %v27
    %v65 = vunpack.c.l.b16 %v28
    %v66 = vunpack.c.l.b16 %v29
    %v67 = vunpack.c.l.b16 %v30
    %v68 = vunpack.c.l.b16 %v31
    %v69 = vunpack.c.l.b16 %v32
    %v70 = vunpack.c.l.b16 %v33
    %v71 = vunpack.c.l.b16 %v34
    %v72 = vunpack.c.l.b16 %v35
    %v73 = vunpack.c.l.b16 %v36
    %v74 = vunpack.c.l.b16 %v37
    %v75 = vunpack.c.l.b16 %v38
    %v76 = vunpack.c.l.b16 %v39
    %v77 = vunpack.c.l.b16 %v40
    %v78 = vunpack.c.l.b16 %v41
    %v79 = vpack.c.b16 %v64, %v63
    %v80 = vpack.c.b16 %v66, %v65
    %v81 = vpack.c.b16 %v68, %v67
    %v82 = vpack.c.b16 %v70, %v69
    %v83 = vpack.c.b16 %v72, %v71
    %v84 = vpack.c.b16 %v74, %v73
    %v85 = vpack.c.b16 %v76, %v75
    %v86 = vpack.c.b16 %v78, %v77
    %vm87 = vcmask 261120
    %v89 = vsel %vm87, %v46, 0
    %v92 = vsel %vm87, %v79, 0
    %v95 = vsel %vm87, %v80, 0
    %v98 = vsel %vm87, %v81, 0
    %v101 = vsel %vm87, %v82, 0
    %v104 = vsel %vm87, %v83, 0
    %v107 = vsel %vm87, %v84, 0
    %v110 = vsel %vm87, %v85, 0
    %v113 = vsel %vm87, %v86, 0
    %115 = vmatprep.subr.bf16.mxu0 0
    %116 = vmatpush1.bf16.xpose.msra.mxu0 %v113
    %117 = vmatprep.subr.bf16.mxu0 0
    %118 = vmatpush1.bf16.xpose.msra.mxu0 %v110
    %119 = vmatprep.subr.bf16.mxu0 0
    %120 = vmatpush1.bf16.xpose.msra.mxu0 %v107
    %121 = vmatprep.subr.bf16.mxu0 0
    %122 = vmatpush1.bf16.xpose.msra.mxu0 %v104
    %123 = vmatprep.subr.bf16.mxu0 0
    %124 = vmatpush1.bf16.xpose.msra.mxu0 %v101
    %125 = vmatprep.subr.bf16.mxu0 0
    %126 = vmatpush1.bf16.xpose.msra.mxu0 %v98
    %127 = vmatprep.subr.bf16.mxu0 0
    %128 = vmatpush1.bf16.xpose.msra.mxu0 %v95
    %129 = vmatprep.subr.bf16.mxu0 0
    %130 = vmatpush1.bf16.xpose.msra.mxu0 %v92
    %131 = vmatprep.subr.bf16.mxu0 0
    %132 = vmatpush2.bf16.xpose.msra.mxu0 0
    %133 = vmatprep.subr.bf16.mxu0 0
    %134 = vmatpush2.bf16.xpose.msra.mxu0 0
    %135 = vmatprep.subr.bf16.mxu0 0
    %136 = vmatpush2.bf16.xpose.msra.mxu0 0
    %137 = vmatprep.subr.bf16.mxu0 0
    %138 = vmatpush2.bf16.xpose.msra.mxu0 0
    %139 = vmatprep.subr.bf16.mxu0 0
    %140 = vmatpush2.bf16.xpose.msra.mxu0 0
    %141 = vmatprep.subr.bf16.mxu0 0
    %142 = vmatpush2.bf16.xpose.msra.mxu0 0
    %143 = vmatprep.subr.bf16.mxu0 0
    %144 = vmatpush2.bf16.xpose.msra.mxu0 0
    %145 = vmatprep.subr.bf16.mxu0 0
    %146 = vmatpush2.bf16.xpose.msra.mxu0 0
    %147 = vmatprep.mubr.bf16.mxu0 0
    %148 = vmatmul.mubr.bf16.gmra.mxu0 %v89
    %v149 = vpop.f32.mrf.mxu0
    %v150 = vadd.f32 0.0, %v149
    %v151 = vpop.f32.mrf.mxu0
    %v152 = vpop.f32.mrf.mxu0
    %v153 = vadd.f32 0.0, %v152
    %v154 = vpop.f32.mrf.mxu0
    %155 = vdwg.mxu0
    %v156 = vadd.f32 %v22, %v150
    %v157 = vadd.f32 %v23, %v153
    %158 = vst [vmem:[#allocation2] sm:$0xff] %v156
    %159 = vst [vmem:[#allocation2 + $0x8] sm:$0xff] %v157
    // Predicated region
    $region18: #{tpu_custom_call.1} parent=1 // pred_check
      %p160 = pneg %p16
    $region19: #{tpu_custom_call.1} parent=1 // pred_check_branch
      %162 = sbr.rel (%p160) target = $region21
    $region20: #{tpu_custom_call.1} parent=1 // pred_region
      %v163 = vld [vmem:[#allocation2] sm:$0xff]
      %v164 = vld [vmem:[#allocation2 + $0x8] sm:$0xff]
      %v165 = vld [vmem:[%s2] sm:$0x1]
      %v167 = vlaneseq
      %v168 = vshrl.u32 %v167, 7
      %v169 = vsub.s32 0, %v168
      %v170 = vrot.slane %v165, %v169
      %v172 = vadd.f32 %v163, %v170
      %v173 = vadd.f32 %v164, %v170
      %174 = vst [vmem:[#allocation3] sm:$0xff] %v172
      %175 = vst [vmem:[#allocation3 + $0x8] sm:$0xff] %v173
    $region21: #{tpu_custom_call.1} parent=1 // pred_fallthru
      _
    // Predicated region
    $region22: #{tpu_custom_call.1} parent=1 // pred_check
      _
    $region23: #{tpu_custom_call.1} parent=1 // pred_check_branch
      %177 = sbr.rel (0) target = $region25
    $region24: #{tpu_custom_call.1} parent=1 // pred_region
      %s179 = ssub.s32 256, 256
      %180 = vsyncadd [#allocation4], %s179
      %s181 = sshll.u32 [#allocation3], 4
      %s182 = int_to_ptr.vmem [resolvable:$true] %s181
      %187 = dma.vmem_to_hbm [thread:$0]  %s182, 256, %s3, [#allocation4], 128, 128, 8
    $region25: #{tpu_custom_call.1} parent=1 // pred_fallthru
      _
    // Predicated region
    $region26: #{tpu_custom_call.1} parent=1 // pred_check
      _
    $region27: #{tpu_custom_call.1} parent=1 // pred_check_branch
      %189 = sbr.rel (0) target = $region29
    $region28: #{tpu_custom_call.1} parent=1 // pred_region
      %190 = dma.done [#allocation4], 256
    $region29: #{tpu_custom_call.1} parent=1 // pred_fallthru
      _
    %191 = vsyncpa [#allocation4], 1

</llo_original>
